<compile_context>
chip_gen: v6e
topology: v6e:2x2x1
jax: 0.10.0
libtpu: 0.0.40
codegen_flags: <defaults>
</compile_context>

<pallas_src>
import functools
import math

import jax
import jax.numpy as jnp
from jax.experimental import pallas as pl
from jax.experimental.pallas import tpu as pltpu


# ---------------------------------------------------------------------------
# helpers
# ---------------------------------------------------------------------------
def _split_heads_store(y_f32, out_ref, head, d_k):
    """Store a (ts, D) f32 tile into a head-major out block (1, head, ts, d_k)."""
    y = y_f32.astype(out_ref.dtype)
    for h in range(head):                 # static, unrolled; store phase only
        out_ref[0, h] = y[:, h * d_k:(h + 1) * d_k]


# ---------------------------------------------------------------------------
# Kernel 1: fused Q/K/V projections (head-major bf16 outputs).
# ---------------------------------------------------------------------------
def _qkv_proj_kernel(xq_ref, xk_ref, xv_ref,
                     wq_ref, bq_ref, wk_ref, bk_ref, wv_ref, bv_ref,
                     q_ref, k_ref, v_ref, *, head, d_k, inv_sqrt_dk):
    """General (cross-attention) path: three activations, three bf16 matmuls."""
    q = jnp.dot(xq_ref[0].astype(jnp.bfloat16), wq_ref[...],
                preferred_element_type=jnp.float32) + bq_ref[...]
    _split_heads_store(q * inv_sqrt_dk, q_ref, head, d_k)   # fold 1/sqrt(d_k)

    k = jnp.dot(xk_ref[0].astype(jnp.bfloat16), wk_ref[...],
                preferred_element_type=jnp.float32) + bk_ref[...]
    _split_heads_store(k, k_ref, head, d_k)

    v = jnp.dot(xv_ref[0].astype(jnp.bfloat16), wv_ref[...],
                preferred_element_type=jnp.float32) + bv_ref[...]
    _split_heads_store(v, v_ref, head, d_k)


def _qkv_proj_self_kernel(x_ref, w_ref, b_ref, q_ref, k_ref, v_ref,
                          *, head, d_k, inv_sqrt_dk):
    """Self-attention path: one activation DMA, one fused (D, 3D) bf16 matmul."""
    D = head * d_k
    y = jnp.dot(x_ref[0].astype(jnp.bfloat16), w_ref[...],
                preferred_element_type=jnp.float32) + b_ref[...]   # (ts, 3D)
    _split_heads_store(y[:, :D] * inv_sqrt_dk, q_ref, head, d_k)
    _split_heads_store(y[:, D:2 * D], k_ref, head, d_k)
    _split_heads_store(y[:, 2 * D:], v_ref, head, d_k)


# ---------------------------------------------------------------------------
# Kernel 2: flash attention (online softmax over kv tiles) + output projection.
# ---------------------------------------------------------------------------
def _flash_attn_kernel(*refs, has_mask):
    if has_mask:
        (q_ref, k_ref, v_ref, mask_ref, wo_ref, bo_ref,
         out_ref, m_scr, l_scr, acc_scr) = refs
    else:
        (q_ref, k_ref, v_ref, wo_ref, bo_ref,
         out_ref, m_scr, l_scr, acc_scr) = refs

    ki = pl.program_id(2)

    @pl.when(ki == 0)
    def _init():
        m_scr[...] = jnp.full(m_scr.shape, -jnp.inf, jnp.float32)
        l_scr[...] = jnp.zeros(l_scr.shape, jnp.float32)
        acc_scr[...] = jnp.zeros(acc_scr.shape, jnp.float32)

    q = q_ref[0]      # (H, TQ, d_k) bf16, pre-scaled by 1/sqrt(d_k)
    k = k_ref[0]      # (H, TK, d_k) bf16
    v = v_ref[0]      # (H, TK, d_k) bf16

    # bf16 operands, f32 accumulate (MXU-native), batched over heads.
    # TODO(synk): when H*TQ*TK*4B grows past a few MiB, bound live ranges by
    # looping over heads (lax.fori_loop, unroll=True) or putting head on grid.
    s = jnp.einsum('hqd,hkd->hqk', q, k,
                   preferred_element_type=jnp.float32)             # (H,TQ,TK)

    if has_mask:
        msk = mask_ref[0]                                          # (TQ,TK) i8
        s = jnp.where(msk[None, :, :] == 0, jnp.float32(-1e9), s)

    # Online softmax update (flash style), all f32.
    m_prev = m_scr[...]
    m_new = jnp.maximum(m_prev, jnp.max(s, axis=-1, keepdims=True))
    alpha = jnp.exp(m_prev - m_new)
    p = jnp.exp(s - m_new)

    l_scr[...] = alpha * l_scr[...] + jnp.sum(p, axis=-1, keepdims=True)
    acc_scr[...] = alpha * acc_scr[...] + jnp.einsum(
        'hqk,hkd->hqd', p.astype(jnp.bfloat16), v,
        preferred_element_type=jnp.float32)                        # (H,TQ,d_k)
    m_scr[...] = m_new

    @pl.when(ki == pl.num_programs(2) - 1)
    def _finalize():
        # Deferred normalization (EUP reciprocal; switch approx=False if
        # bit-tighter agreement with the f32 module is required).
        inv_l = pl.reciprocal(l_scr[...], approx=True)
        ctx = (acc_scr[...] * inv_l).astype(jnp.bfloat16)          # (H,TQ,d_k)
        # Output projection folded in, accumulated head-by-head into one
        # (TQ, D) f32 -- no (H, TQ, D) temporary, no cross-head XLU reduce.
        out = jnp.dot(ctx[0], wo_ref[0], preferred_element_type=jnp.float32)
        for h in range(1, ctx.shape[0]):
            out = out + jnp.dot(ctx[h], wo_ref[h],
                                preferred_element_type=jnp.float32)
        out_ref[0] = (out + bo_ref[...]).astype(out_ref.dtype)


# ---------------------------------------------------------------------------
# Wrapper
# ---------------------------------------------------------------------------
def _pick_tile(n, ladder):
    for t in ladder:
        if n >= t and n % t == 0:
            return t
    return n


def _vmem_and_tile_ladders():
    """Per-generation VMEM budget + tile ladders (re-derived for v7x 64 MiB)."""
    try:
        cap = getattr(pltpu.get_tpu_info(), "vmem_capacity_bytes",
                      64 * 1024 * 1024)
    except Exception:
        cap = 64 * 1024 * 1024            # conservative (v7x-sized) fallback
    if cap >= 100 * 1024 * 1024:          # v5e / v6e: 128 MiB physical
        return 96 * 1024 * 1024, (1024, 512, 256, 128), (256, 128), (256, 128)
    # v7x: 64 MiB physical -> headroom for internal scratch, TK capped at 128
    return 48 * 1024 * 1024, (512, 256, 128), (256, 128), (128,)


def multi_headed_attention(query, key, value, mask, params, *, head):
    """query/key/value: (B, S, D); mask: (B, S, S) (nonzero = attend) or None."""
    B, S, D = query.shape
    assert D % head == 0
    d_k = D // head
    dtype = query.dtype
    inv_sqrt_dk = 1.0 / math.sqrt(d_k)
    itemsize = jnp.dtype(dtype).itemsize

    is_self = (query is key) and (key is value)
    vmem_limit, ts_ladder, tq_ladder, tk_ladder = _vmem_and_tile_ladders()

    # Harden tiling: pad awkward sequence lengths to a multiple of 128 instead
    # of silently falling back to a full (S, S) block (VMEM cliff on v7x).
    if S <= 256 or S % 128 == 0:
        S_pad = S
    else:
        S_pad = ((S + 127) // 128) * 128
    pad = S_pad - S
    if pad:
        padw = ((0, 0), (0, pad), (0, 0))
        query = jnp.pad(query, padw)
        if is_self:
            key = value = query
        else:
            key = jnp.pad(key, padw)
            value = jnp.pad(value, padw)
        if mask is not None:
            mask = jnp.pad(mask, ((0, 0), (0, pad), (0, pad)))
        else:
            # exclude padded keys; padded query rows are sliced off below
            mask = jnp.broadcast_to((jnp.arange(S_pad) < S)[None, None, :],
                                    (B, S_pad, S_pad))

    has_mask = mask is not None
    if has_mask:
        mask_i8 = (mask != 0).astype(jnp.int8)    # 4x less DMA than int32
    # TODO(synk): for causal masks, generate the mask in-kernel from iota and
    # skip fully-masked kv tiles via scalar-prefetched tile validity.

    ts = _pick_tile(S_pad, ts_ladder)
    tq = _pick_tile(S_pad, tq_ladder)
    tk = _pick_tile(S_pad, tk_ladder)
    n_ts, n_qt, n_kt = S_pad // ts, S_pad // tq, S_pad // tk

    # ---------------- kernel 1: fused Q/K/V projections ----------------
    head_out_spec = pl.BlockSpec((1, head, ts, d_k), lambda b, si: (b, 0, si, 0))
    act_spec = pl.BlockSpec((1, ts, D), lambda b, si: (b, si, 0))
    qkv_out = jax.ShapeDtypeStruct((B, head, S_pad, d_k), jnp.bfloat16)
    proj_flops = int(2 * B * S_pad * D * 3 * D + 3 * B * S_pad * D)
    proj_cparams = pltpu.CompilerParams(
        dimension_semantics=("parallel", "parallel"),
        vmem_limit_bytes=vmem_limit)

    if is_self:
        w_qkv = jnp.concatenate([params["Wq"], params["Wk"], params["Wv"]],
                                axis=1).astype(jnp.bfloat16)       # (D, 3D)
        b_qkv = jnp.concatenate([params["bq"], params["bk"], params["bv"]],
                                axis=1).astype(jnp.float32)        # (1, 3D)
        proj_bytes = int(B * S_pad * D * itemsize + 3 * D * D * 2 + 3 * D * 4
                         + 3 * B * S_pad * D * 2)
        q_h, k_h, v_h = pl.pallas_call(
            functools.partial(_qkv_proj_self_kernel, head=head, d_k=d_k,
                              inv_sqrt_dk=inv_sqrt_dk),
            out_shape=(qkv_out, qkv_out, qkv_out),
            grid_spec=pltpu.PrefetchScalarGridSpec(
                num_scalar_prefetch=0, grid=(B, n_ts),
                in_specs=[act_spec,
                          pl.BlockSpec((D, 3 * D), lambda b, si: (0, 0)),
                          pl.BlockSpec((1, 3 * D), lambda b, si: (0, 0))],
                out_specs=[head_out_spec, head_out_spec, head_out_spec]),
            compiler_params=proj_cparams,
            cost_estimate=pl.CostEstimate(flops=proj_flops, transcendentals=0,
                                          bytes_accessed=proj_bytes),
        )(query, w_qkv, b_qkv)
    else:
        w_spec = pl.BlockSpec((D, D), lambda b, si: (0, 0))   # grid-invariant
        b_spec = pl.BlockSpec((1, D), lambda b, si: (0, 0))
        proj_bytes = int(3 * B * S_pad * D * itemsize + 3 * D * D * 2
                         + 3 * D * 4 + 3 * B * S_pad * D * 2)
        q_h, k_h, v_h = pl.pallas_call(
            functools.partial(_qkv_proj_kernel, head=head, d_k=d_k,
                              inv_sqrt_dk=inv_sqrt_dk),
            out_shape=(qkv_out, qkv_out, qkv_out),
            grid_spec=pltpu.PrefetchScalarGridSpec(
                num_scalar_prefetch=0, grid=(B, n_ts),
                in_specs=[act_spec, act_spec, act_spec,
                          w_spec, b_spec, w_spec, b_spec, w_spec, b_spec],
                out_specs=[head_out_spec, head_out_spec, head_out_spec]),
            compiler_params=proj_cparams,
            cost_estimate=pl.CostEstimate(flops=proj_flops, transcendentals=0,
                                          bytes_accessed=proj_bytes),
        )(query, key, value,
          params["Wq"].astype(jnp.bfloat16), params["bq"].astype(jnp.float32),
          params["Wk"].astype(jnp.bfloat16), params["bk"].astype(jnp.float32),
          params["Wv"].astype(jnp.bfloat16), params["bv"].astype(jnp.float32))

    wo_h = params["Wo"].reshape(head, d_k, D).astype(jnp.bfloat16)
    bo = params["bo"].astype(jnp.float32)

    # ------------- kernel 2: flash attention + output projection -------------
    q_spec = pl.BlockSpec((1, head, tq, d_k), lambda b, qi, ki: (b, 0, qi, 0))
    kv_spec = pl.BlockSpec((1, head, tk, d_k), lambda b, qi, ki: (b, 0, ki, 0))
    wo_spec = pl.BlockSpec((head, d_k, D), lambda b, qi, ki: (0, 0, 0))
    bo_spec = pl.BlockSpec((1, D), lambda b, qi, ki: (0, 0))
    out_spec = pl.BlockSpec((1, tq, D), lambda b, qi, ki: (b, qi, 0))  # lane-dense

    in_specs = [q_spec, kv_spec, kv_spec]
    inputs = [q_h, k_h, v_h]
    if has_mask:
        in_specs.append(pl.BlockSpec((1, tq, tk), lambda b, qi, ki: (b, qi, ki)))
        inputs.append(mask_i8)
    in_specs += [wo_spec, bo_spec]
    inputs += [wo_h, bo]

    attn_bytes = int(B * S_pad * D * 2                       # q (bf16), once
                     + n_qt * 2 * B * S_pad * D * 2          # k/v refetch per q-tile
                     + (B * S_pad * S_pad if has_mask else 0)
                     + head * d_k * D * 2 + D * 4
                     + B * S_pad * D * itemsize)              # output write
    attn_cost = pl.CostEstimate(
        flops=int(4 * B * head * S_pad * S_pad * d_k + 2 * B * S_pad * D * D),
        transcendentals=int(B * head * S_pad * S_pad),
        bytes_accessed=attn_bytes)

    out = pl.pallas_call(
        functools.partial(_flash_attn_kernel, has_mask=has_mask),
        out_shape=jax.ShapeDtypeStruct((B, S_pad, D), dtype),
        grid_spec=pltpu.PrefetchScalarGridSpec(
            num_scalar_prefetch=0,
            grid=(B, n_qt, n_kt),
            in_specs=in_specs,
            out_specs=out_spec,
            # m/l scratch is lane-padded 1->128 in VMEM; counts against the
            # budget when sizing TK on v7x.
            scratch_shapes=[pltpu.VMEM((head, tq, 1), jnp.float32),    # m
                            pltpu.VMEM((head, tq, 1), jnp.float32),    # l
                            pltpu.VMEM((head, tq, d_k), jnp.float32)   # acc
                            ]),
        compiler_params=pltpu.CompilerParams(
            # batch AND q-tile parallel -> both v7x TensorCores busy at B=1
            dimension_semantics=("parallel", "parallel", "arbitrary"),
            vmem_limit_bytes=vmem_limit),
        cost_estimate=attn_cost,
    )(*inputs)

    return out[:, :S, :] if pad else out


# ---------------------------------------------------------------------------
# Pure-JAX reference mirroring the PyTorch forward.
# ---------------------------------------------------------------------------
def _reference(query, key, value, mask, params, *, head):
    B, S, D = query.shape
    d_k = D // head

    def proj(x, W, b):
        y = x @ W + b
        return y.reshape(B, S, head, d_k).transpose(0, 2, 1, 3)

    q = proj(query, params["Wq"], params["bq"])
    k = proj(key, params["Wk"], params["bk"])
    v = proj(value, params["Wv"], params["bv"])

    scores = jnp.einsum("bhqd,bhkd->bhqk", q, k) / math.sqrt(d_k)
    if mask is not None:
        scores = jnp.where(mask[:, None, :, :] == 0, -1e9, scores)
    p = jax.nn.softmax(scores, axis=-1)
    x = jnp.einsum("bhqk,bhkd->bhqd", p, v)
    x = x.transpose(0, 2, 1, 3).reshape(B, S, D)
    return x @ params["Wo"] + params["bo"]


if __name__ == "__main__":
    B, S, D, H = 2, 8, 32, 4

    key0 = jax.random.PRNGKey(0)
    ks = jax.random.split(key0, 12)

    scale = 1.0 / math.sqrt(D)
    params = {
        "Wq": jax.random.uniform(ks[0], (D, D), jnp.float32, -scale, scale),
        "bq": jax.random.uniform(ks[1], (1, D), jnp.float32, -scale, scale),
        "Wk": jax.random.uniform(ks[2], (D, D), jnp.float32, -scale, scale),
        "bk": jax.random.uniform(ks[3], (1, D), jnp.float32, -scale, scale),
        "Wv": jax.random.uniform(ks[4], (D, D), jnp.float32, -scale, scale),
        "bv": jax.random.uniform(ks[5], (1, D), jnp.float32, -scale, scale),
        "Wo": jax.random.uniform(ks[6], (D, D), jnp.float32, -scale, scale),
        "bo": jax.random.uniform(ks[7], (1, D), jnp.float32, -scale, scale),
    }

    query = jax.random.normal(ks[8], (B, S, D), jnp.float32)
    key_x = jax.random.normal(ks[9], (B, S, D), jnp.float32)
    value = jax.random.normal(ks[10], (B, S, D), jnp.float32)
    # random mask: 1 = attend, 0 = masked; keep at least one valid key per row
    mask = (jax.random.uniform(ks[11], (B, S, S)) > 0.2).astype(jnp.int32)
    mask = mask.at[:, :, 0].set(1)

    # Tolerance covers bf16 MXU operands + approximate reciprocal; softmax and
    # all accumulations are f32.
    TOL = dict(atol=2e-2, rtol=2e-2)

    # 1) cross-attention path with explicit mask
    out = multi_headed_attention(query, key_x, value, mask, params, head=H)
    out = jax.block_until_ready(out)
    ref = _reference(query, key_x, value, mask, params, head=H)
    assert jnp.allclose(out, ref, **TOL), "mismatch vs reference (masked)"

    # 2) self-attention path (fused QKV weight, single activation DMA, no mask)
    out2 = multi_headed_attention(query, query, query, None, params, head=H)
    out2 = jax.block_until_ready(out2)
    ref2 = _reference(query, query, query, None, params, head=H)
    assert jnp.allclose(out2, ref2, **TOL), "mismatch vs reference (self)"

    # TODO(synk): dropout>0 path is not implemented (module default dropout=0.0).
    print("KERNEL_OK")
</pallas_src>

<mosaic_0001>
module attributes {stable_mosaic.version = 11 : i64} {
  func.func @_qkv_proj_kernel(%arg0: i32, %arg1: i32, %arg2: memref<1x8x32xf32, #tpu.memory_space<vmem>>, %arg3: memref<1x8x32xf32, #tpu.memory_space<vmem>>, %arg4: memref<1x8x32xf32, #tpu.memory_space<vmem>>, %arg5: memref<32x32xbf16, #tpu.memory_space<vmem>>, %arg6: memref<1x32xf32, #tpu.memory_space<vmem>>, %arg7: memref<32x32xbf16, #tpu.memory_space<vmem>>, %arg8: memref<1x32xf32, #tpu.memory_space<vmem>>, %arg9: memref<32x32xbf16, #tpu.memory_space<vmem>>, %arg10: memref<1x32xf32, #tpu.memory_space<vmem>>, %arg11: memref<1x4x8x8xbf16, #tpu.memory_space<vmem>>, %arg12: memref<1x4x8x8xbf16, #tpu.memory_space<vmem>>, %arg13: memref<1x4x8x8xbf16, #tpu.memory_space<vmem>>) attributes {dimension_semantics = [#tpu.dimension_semantics<parallel>, #tpu.dimension_semantics<parallel>], iteration_bounds = array<i64: 2, 1>, scalar_prefetch = 0 : i64, scratch_operands = 0 : i64, tpu.core_type = #tpu.core_type<tc>, window_params = [{transform_indices = @transform_0, window_bounds = array<i64: 1, 8, 32>}, {transform_indices = @transform_1, window_bounds = array<i64: 1, 8, 32>}, {transform_indices = @transform_2, window_bounds = array<i64: 1, 8, 32>}, {pipeline_mode = #tpu.pipeline_mode<synchronous>, transform_indices = @transform_3, window_bounds = array<i64: 32, 32>}, {pipeline_mode = #tpu.pipeline_mode<synchronous>, transform_indices = @transform_4, window_bounds = array<i64: 1, 32>}, {pipeline_mode = #tpu.pipeline_mode<synchronous>, transform_indices = @transform_5, window_bounds = array<i64: 32, 32>}, {pipeline_mode = #tpu.pipeline_mode<synchronous>, transform_indices = @transform_6, window_bounds = array<i64: 1, 32>}, {pipeline_mode = #tpu.pipeline_mode<synchronous>, transform_indices = @transform_7, window_bounds = array<i64: 32, 32>}, {pipeline_mode = #tpu.pipeline_mode<synchronous>, transform_indices = @transform_8, window_bounds = array<i64: 1, 32>}, {transform_indices = @transform_9, window_bounds = array<i64: 1, 4, 8, 8>}, {transform_indices = @transform_10, window_bounds = array<i64: 1, 4, 8, 8>}, {transform_indices = @transform_11, window_bounds = array<i64: 1, 4, 8, 8>}]} {
    %c0 = arith.constant 0 : index
    %c0_0 = arith.constant 0 : index
    %c0_1 = arith.constant 0 : index
    %0 = vector.load %arg2[%c0, %c0_0, %c0_1] : memref<1x8x32xf32, #tpu.memory_space<vmem>>, vector<1x8x32xf32>
    %1 = vector.shape_cast %0 : vector<1x8x32xf32> to vector<8x32xf32>
    %2 = arith.truncf %1 : vector<8x32xf32> to vector<8x32xbf16>
    %c0_2 = arith.constant 0 : index
    %c0_3 = arith.constant 0 : index
    %3 = vector.load %arg5[%c0_2, %c0_3] : memref<32x32xbf16, #tpu.memory_space<vmem>>, vector<32x32xbf16>
    %cst = arith.constant dense<0.000000e+00> : vector<8x32xf32>
    %4 = tpu.matmul %2, %3, %cst {dimension_numbers = #tpu.dot_dimension_numbers<[1], [0], [0], [1], [0, 0, 1, 1], [], []>} : vector<8x32xbf16>, vector<32x32xbf16>, vector<8x32xf32> -> vector<8x32xf32>
    %c0_4 = arith.constant 0 : index
    %c0_5 = arith.constant 0 : index
    %5 = vector.load %arg6[%c0_4, %c0_5] : memref<1x32xf32, #tpu.memory_space<vmem>>, vector<1x32xf32>
    %6 = vector.broadcast %5 : vector<1x32xf32> to vector<8x32xf32>
    %7 = arith.addf %4, %6 : vector<8x32xf32>
    %cst_6 = arith.constant 0.353553385 : f32
    %8 = vector.broadcast %cst_6 : f32 to vector<8x32xf32>
    %9 = arith.mulf %7, %8 : vector<8x32xf32>
    %10 = arith.truncf %9 : vector<8x32xf32> to vector<8x32xbf16>
    %11 = vector.extract_strided_slice %10 {offsets = [0, 0], sizes = [8, 8], strides = [1, 1]} : vector<8x32xbf16> to vector<8x8xbf16>
    %c0_7 = arith.constant 0 : index
    %c0_8 = arith.constant 0 : index
    %c0_9 = arith.constant 0 : index
    %c0_10 = arith.constant 0 : index
    %12 = vector.load %arg11[%c0_7, %c0_8, %c0_9, %c0_10] : memref<1x4x8x8xbf16, #tpu.memory_space<vmem>>, vector<1x1x8x8xbf16>
    %13 = vector.shape_cast %12 : vector<1x1x8x8xbf16> to vector<8x8xbf16>
    %14 = vector.shape_cast %11 : vector<8x8xbf16> to vector<1x1x8x8xbf16>
    tpu.vector_store %arg11[%c0_7, %c0_8, %c0_9, %c0_10], %14 {strides = array<i32>} : memref<1x4x8x8xbf16, #tpu.memory_space<vmem>>, vector<1x1x8x8xbf16>,
    %15 = vector.extract_strided_slice %10 {offsets = [0, 8], sizes = [8, 8], strides = [1, 1]} : vector<8x32xbf16> to vector<8x8xbf16>
    %c0_11 = arith.constant 0 : index
    %c1 = arith.constant 1 : index
    %c0_12 = arith.constant 0 : index
    %c0_13 = arith.constant 0 : index
    %16 = vector.load %arg11[%c0_11, %c1, %c0_12, %c0_13] : memref<1x4x8x8xbf16, #tpu.memory_space<vmem>>, vector<1x1x8x8xbf16>
    %17 = vector.shape_cast %16 : vector<1x1x8x8xbf16> to vector<8x8xbf16>
    %18 = vector.shape_cast %15 : vector<8x8xbf16> to vector<1x1x8x8xbf16>
    tpu.vector_store %arg11[%c0_11, %c1, %c0_12, %c0_13], %18 {strides = array<i32>} : memref<1x4x8x8xbf16, #tpu.memory_space<vmem>>, vector<1x1x8x8xbf16>,
    %19 = vector.extract_strided_slice %10 {offsets = [0, 16], sizes = [8, 8], strides = [1, 1]} : vector<8x32xbf16> to vector<8x8xbf16>
    %c0_14 = arith.constant 0 : index
    %c2 = arith.constant 2 : index
    %c0_15 = arith.constant 0 : index
    %c0_16 = arith.constant 0 : index
    %20 = vector.load %arg11[%c0_14, %c2, %c0_15, %c0_16] : memref<1x4x8x8xbf16, #tpu.memory_space<vmem>>, vector<1x1x8x8xbf16>
    %21 = vector.shape_cast %20 : vector<1x1x8x8xbf16> to vector<8x8xbf16>
    %22 = vector.shape_cast %19 : vector<8x8xbf16> to vector<1x1x8x8xbf16>
    tpu.vector_store %arg11[%c0_14, %c2, %c0_15, %c0_16], %22 {strides = array<i32>} : memref<1x4x8x8xbf16, #tpu.memory_space<vmem>>, vector<1x1x8x8xbf16>,
    %23 = vector.extract_strided_slice %10 {offsets = [0, 24], sizes = [8, 8], strides = [1, 1]} : vector<8x32xbf16> to vector<8x8xbf16>
    %c0_17 = arith.constant 0 : index
    %c3 = arith.constant 3 : index
    %c0_18 = arith.constant 0 : index
    %c0_19 = arith.constant 0 : index
    %24 = vector.load %arg11[%c0_17, %c3, %c0_18, %c0_19] : memref<1x4x8x8xbf16, #tpu.memory_space<vmem>>, vector<1x1x8x8xbf16>
    %25 = vector.shape_cast %24 : vector<1x1x8x8xbf16> to vector<8x8xbf16>
    %26 = vector.shape_cast %23 : vector<8x8xbf16> to vector<1x1x8x8xbf16>
    tpu.vector_store %arg11[%c0_17, %c3, %c0_18, %c0_19], %26 {strides = array<i32>} : memref<1x4x8x8xbf16, #tpu.memory_space<vmem>>, vector<1x1x8x8xbf16>,
    %c0_20 = arith.constant 0 : index
    %c0_21 = arith.constant 0 : index
    %c0_22 = arith.constant 0 : index
    %27 = vector.load %arg3[%c0_20, %c0_21, %c0_22] : memref<1x8x32xf32, #tpu.memory_space<vmem>>, vector<1x8x32xf32>
    %28 = vector.shape_cast %27 : vector<1x8x32xf32> to vector<8x32xf32>
    %29 = arith.truncf %28 : vector<8x32xf32> to vector<8x32xbf16>
    %c0_23 = arith.constant 0 : index
    %c0_24 = arith.constant 0 : index
    %30 = vector.load %arg7[%c0_23, %c0_24] : memref<32x32xbf16, #tpu.memory_space<vmem>>, vector<32x32xbf16>
    %cst_25 = arith.constant dense<0.000000e+00> : vector<8x32xf32>
    %31 = tpu.matmul %29, %30, %cst_25 {dimension_numbers = #tpu.dot_dimension_numbers<[1], [0], [0], [1], [0, 0, 1, 1], [], []>} : vector<8x32xbf16>, vector<32x32xbf16>, vector<8x32xf32> -> vector<8x32xf32>
    %c0_26 = arith.constant 0 : index
    %c0_27 = arith.constant 0 : index
    %32 = vector.load %arg8[%c0_26, %c0_27] : memref<1x32xf32, #tpu.memory_space<vmem>>, vector<1x32xf32>
    %33 = vector.broadcast %32 : vector<1x32xf32> to vector<8x32xf32>
    %34 = arith.addf %31, %33 : vector<8x32xf32>
    %35 = arith.truncf %34 : vector<8x32xf32> to vector<8x32xbf16>
    %36 = vector.extract_strided_slice %35 {offsets = [0, 0], sizes = [8, 8], strides = [1, 1]} : vector<8x32xbf16> to vector<8x8xbf16>
    %c0_28 = arith.constant 0 : index
    %c0_29 = arith.constant 0 : index
    %c0_30 = arith.constant 0 : index
    %c0_31 = arith.constant 0 : index
    %37 = vector.load %arg12[%c0_28, %c0_29, %c0_30, %c0_31] : memref<1x4x8x8xbf16, #tpu.memory_space<vmem>>, vector<1x1x8x8xbf16>
    %38 = vector.shape_cast %37 : vector<1x1x8x8xbf16> to vector<8x8xbf16>
    %39 = vector.shape_cast %36 : vector<8x8xbf16> to vector<1x1x8x8xbf16>
    tpu.vector_store %arg12[%c0_28, %c0_29, %c0_30, %c0_31], %39 {strides = array<i32>} : memref<1x4x8x8xbf16, #tpu.memory_space<vmem>>, vector<1x1x8x8xbf16>,
    %40 = vector.extract_strided_slice %35 {offsets = [0, 8], sizes = [8, 8], strides = [1, 1]} : vector<8x32xbf16> to vector<8x8xbf16>
    %c0_32 = arith.constant 0 : index
    %c1_33 = arith.constant 1 : index
    %c0_34 = arith.constant 0 : index
    %c0_35 = arith.constant 0 : index
    %41 = vector.load %arg12[%c0_32, %c1_33, %c0_34, %c0_35] : memref<1x4x8x8xbf16, #tpu.memory_space<vmem>>, vector<1x1x8x8xbf16>
    %42 = vector.shape_cast %41 : vector<1x1x8x8xbf16> to vector<8x8xbf16>
    %43 = vector.shape_cast %40 : vector<8x8xbf16> to vector<1x1x8x8xbf16>
    tpu.vector_store %arg12[%c0_32, %c1_33, %c0_34, %c0_35], %43 {strides = array<i32>} : memref<1x4x8x8xbf16, #tpu.memory_space<vmem>>, vector<1x1x8x8xbf16>,
    %44 = vector.extract_strided_slice %35 {offsets = [0, 16], sizes = [8, 8], strides = [1, 1]} : vector<8x32xbf16> to vector<8x8xbf16>
    %c0_36 = arith.constant 0 : index
    %c2_37 = arith.constant 2 : index
    %c0_38 = arith.constant 0 : index
    %c0_39 = arith.constant 0 : index
    %45 = vector.load %arg12[%c0_36, %c2_37, %c0_38, %c0_39] : memref<1x4x8x8xbf16, #tpu.memory_space<vmem>>, vector<1x1x8x8xbf16>
    %46 = vector.shape_cast %45 : vector<1x1x8x8xbf16> to vector<8x8xbf16>
    %47 = vector.shape_cast %44 : vector<8x8xbf16> to vector<1x1x8x8xbf16>
    tpu.vector_store %arg12[%c0_36, %c2_37, %c0_38, %c0_39], %47 {strides = array<i32>} : memref<1x4x8x8xbf16, #tpu.memory_space<vmem>>, vector<1x1x8x8xbf16>,
    %48 = vector.extract_strided_slice %35 {offsets = [0, 24], sizes = [8, 8], strides = [1, 1]} : vector<8x32xbf16> to vector<8x8xbf16>
    %c0_40 = arith.constant 0 : index
    %c3_41 = arith.constant 3 : index
    %c0_42 = arith.constant 0 : index
    %c0_43 = arith.constant 0 : index
    %49 = vector.load %arg12[%c0_40, %c3_41, %c0_42, %c0_43] : memref<1x4x8x8xbf16, #tpu.memory_space<vmem>>, vector<1x1x8x8xbf16>
    %50 = vector.shape_cast %49 : vector<1x1x8x8xbf16> to vector<8x8xbf16>
    %51 = vector.shape_cast %48 : vector<8x8xbf16> to vector<1x1x8x8xbf16>
    tpu.vector_store %arg12[%c0_40, %c3_41, %c0_42, %c0_43], %51 {strides = array<i32>} : memref<1x4x8x8xbf16, #tpu.memory_space<vmem>>, vector<1x1x8x8xbf16>,
    %c0_44 = arith.constant 0 : index
    %c0_45 = arith.constant 0 : index
    %c0_46 = arith.constant 0 : index
    %52 = vector.load %arg4[%c0_44, %c0_45, %c0_46] : memref<1x8x32xf32, #tpu.memory_space<vmem>>, vector<1x8x32xf32>
    %53 = vector.shape_cast %52 : vector<1x8x32xf32> to vector<8x32xf32>
    %54 = arith.truncf %53 : vector<8x32xf32> to vector<8x32xbf16>
    %c0_47 = arith.constant 0 : index
    %c0_48 = arith.constant 0 : index
    %55 = vector.load %arg9[%c0_47, %c0_48] : memref<32x32xbf16, #tpu.memory_space<vmem>>, vector<32x32xbf16>
    %cst_49 = arith.constant dense<0.000000e+00> : vector<8x32xf32>
    %56 = tpu.matmul %54, %55, %cst_49 {dimension_numbers = #tpu.dot_dimension_numbers<[1], [0], [0], [1], [0, 0, 1, 1], [], []>} : vector<8x32xbf16>, vector<32x32xbf16>, vector<8x32xf32> -> vector<8x32xf32>
    %c0_50 = arith.constant 0 : index
    %c0_51 = arith.constant 0 : index
    %57 = vector.load %arg10[%c0_50, %c0_51] : memref<1x32xf32, #tpu.memory_space<vmem>>, vector<1x32xf32>
    %58 = vector.broadcast %57 : vector<1x32xf32> to vector<8x32xf32>
    %59 = arith.addf %56, %58 : vector<8x32xf32>
    %60 = arith.truncf %59 : vector<8x32xf32> to vector<8x32xbf16>
    %61 = vector.extract_strided_slice %60 {offsets = [0, 0], sizes = [8, 8], strides = [1, 1]} : vector<8x32xbf16> to vector<8x8xbf16>
    %c0_52 = arith.constant 0 : index
    %c0_53 = arith.constant 0 : index
    %c0_54 = arith.constant 0 : index
    %c0_55 = arith.constant 0 : index
    %62 = vector.load %arg13[%c0_52, %c0_53, %c0_54, %c0_55] : memref<1x4x8x8xbf16, #tpu.memory_space<vmem>>, vector<1x1x8x8xbf16>
    %63 = vector.shape_cast %62 : vector<1x1x8x8xbf16> to vector<8x8xbf16>
    %64 = vector.shape_cast %61 : vector<8x8xbf16> to vector<1x1x8x8xbf16>
    tpu.vector_store %arg13[%c0_52, %c0_53, %c0_54, %c0_55], %64 {strides = array<i32>} : memref<1x4x8x8xbf16, #tpu.memory_space<vmem>>, vector<1x1x8x8xbf16>,
    %65 = vector.extract_strided_slice %60 {offsets = [0, 8], sizes = [8, 8], strides = [1, 1]} : vector<8x32xbf16> to vector<8x8xbf16>
    %c0_56 = arith.constant 0 : index
    %c1_57 = arith.constant 1 : index
    %c0_58 = arith.constant 0 : index
    %c0_59 = arith.constant 0 : index
    %66 = vector.load %arg13[%c0_56, %c1_57, %c0_58, %c0_59] : memref<1x4x8x8xbf16, #tpu.memory_space<vmem>>, vector<1x1x8x8xbf16>
    %67 = vector.shape_cast %66 : vector<1x1x8x8xbf16> to vector<8x8xbf16>
    %68 = vector.shape_cast %65 : vector<8x8xbf16> to vector<1x1x8x8xbf16>
    tpu.vector_store %arg13[%c0_56, %c1_57, %c0_58, %c0_59], %68 {strides = array<i32>} : memref<1x4x8x8xbf16, #tpu.memory_space<vmem>>, vector<1x1x8x8xbf16>,
    %69 = vector.extract_strided_slice %60 {offsets = [0, 16], sizes = [8, 8], strides = [1, 1]} : vector<8x32xbf16> to vector<8x8xbf16>
    %c0_60 = arith.constant 0 : index
    %c2_61 = arith.constant 2 : index
    %c0_62 = arith.constant 0 : index
    %c0_63 = arith.constant 0 : index
    %70 = vector.load %arg13[%c0_60, %c2_61, %c0_62, %c0_63] : memref<1x4x8x8xbf16, #tpu.memory_space<vmem>>, vector<1x1x8x8xbf16>
    %71 = vector.shape_cast %70 : vector<1x1x8x8xbf16> to vector<8x8xbf16>
    %72 = vector.shape_cast %69 : vector<8x8xbf16> to vector<1x1x8x8xbf16>
    tpu.vector_store %arg13[%c0_60, %c2_61, %c0_62, %c0_63], %72 {strides = array<i32>} : memref<1x4x8x8xbf16, #tpu.memory_space<vmem>>, vector<1x1x8x8xbf16>,
    %73 = vector.extract_strided_slice %60 {offsets = [0, 24], sizes = [8, 8], strides = [1, 1]} : vector<8x32xbf16> to vector<8x8xbf16>
    %c0_64 = arith.constant 0 : index
    %c3_65 = arith.constant 3 : index
    %c0_66 = arith.constant 0 : index
    %c0_67 = arith.constant 0 : index
    %74 = vector.load %arg13[%c0_64, %c3_65, %c0_66, %c0_67] : memref<1x4x8x8xbf16, #tpu.memory_space<vmem>>, vector<1x1x8x8xbf16>
    %75 = vector.shape_cast %74 : vector<1x1x8x8xbf16> to vector<8x8xbf16>
    %76 = vector.shape_cast %73 : vector<8x8xbf16> to vector<1x1x8x8xbf16>
    tpu.vector_store %arg13[%c0_64, %c3_65, %c0_66, %c0_67], %76 {strides = array<i32>} : memref<1x4x8x8xbf16, #tpu.memory_space<vmem>>, vector<1x1x8x8xbf16>,
    return
  }
  func.func @transform_0(%arg0: i32, %arg1: i32) -> (i32, i32, i32) {
    %c0_i32 = arith.constant 0 : i32
    %c0_i32_0 = arith.constant 0 : i32
    return %arg0, %arg1, %c0_i32 : i32, i32, i32
  }
  func.func @transform_1(%arg0: i32, %arg1: i32) -> (i32, i32, i32) {
    %c0_i32 = arith.constant 0 : i32
    %c0_i32_0 = arith.constant 0 : i32
    return %arg0, %arg1, %c0_i32 : i32, i32, i32
  }
  func.func @transform_2(%arg0: i32, %arg1: i32) -> (i32, i32, i32) {
    %c0_i32 = arith.constant 0 : i32
    %c0_i32_0 = arith.constant 0 : i32
    return %arg0, %arg1, %c0_i32 : i32, i32, i32
  }
  func.func @transform_3(%arg0: i32, %arg1: i32) -> (i32, i32) {
    %c0_i32 = arith.constant 0 : i32
    %c0_i32_0 = arith.constant 0 : i32
    %c0_i32_1 = arith.constant 0 : i32
    return %c0_i32, %c0_i32_0 : i32, i32
  }
  func.func @transform_4(%arg0: i32, %arg1: i32) -> (i32, i32) {
    %c0_i32 = arith.constant 0 : i32
    %c0_i32_0 = arith.constant 0 : i32
    %c0_i32_1 = arith.constant 0 : i32
    return %c0_i32, %c0_i32_0 : i32, i32
  }
  func.func @transform_5(%arg0: i32, %arg1: i32) -> (i32, i32) {
    %c0_i32 = arith.constant 0 : i32
    %c0_i32_0 = arith.constant 0 : i32
    %c0_i32_1 = arith.constant 0 : i32
    return %c0_i32, %c0_i32_0 : i32, i32
  }
  func.func @transform_6(%arg0: i32, %arg1: i32) -> (i32, i32) {
    %c0_i32 = arith.constant 0 : i32
    %c0_i32_0 = arith.constant 0 : i32
    %c0_i32_1 = arith.constant 0 : i32
    return %c0_i32, %c0_i32_0 : i32, i32
  }
  func.func @transform_7(%arg0: i32, %arg1: i32) -> (i32, i32) {
    %c0_i32 = arith.constant 0 : i32
    %c0_i32_0 = arith.constant 0 : i32
    %c0_i32_1 = arith.constant 0 : i32
    return %c0_i32, %c0_i32_0 : i32, i32
  }
  func.func @transform_8(%arg0: i32, %arg1: i32) -> (i32, i32) {
    %c0_i32 = arith.constant 0 : i32
    %c0_i32_0 = arith.constant 0 : i32
    %c0_i32_1 = arith.constant 0 : i32
    return %c0_i32, %c0_i32_0 : i32, i32
  }
  func.func @transform_9(%arg0: i32, %arg1: i32) -> (i32, i32, i32, i32) {
    %c0_i32 = arith.constant 0 : i32
    %c0_i32_0 = arith.constant 0 : i32
    %c0_i32_1 = arith.constant 0 : i32
    return %arg0, %c0_i32, %arg1, %c0_i32_0 : i32, i32, i32, i32
  }
  func.func @transform_10(%arg0: i32, %arg1: i32) -> (i32, i32, i32, i32) {
    %c0_i32 = arith.constant 0 : i32
    %c0_i32_0 = arith.constant 0 : i32
    %c0_i32_1 = arith.constant 0 : i32
    return %arg0, %c0_i32, %arg1, %c0_i32_0 : i32, i32, i32, i32
  }
  func.func @transform_11(%arg0: i32, %arg1: i32) -> (i32, i32, i32, i32) {
    %c0_i32 = arith.constant 0 : i32
    %c0_i32_0 = arith.constant 0 : i32
    %c0_i32_1 = arith.constant 0 : i32
    return %arg0, %c0_i32, %arg1, %c0_i32_0 : i32, i32, i32, i32
  }
}

</mosaic_0001>

<llo_original>
// kernel: tpu_custom_call.1
$region0: #{tpu_custom_call.1}
  #allocation0 [shape = 'u32[]', space=smem, size = 0x4, offset = 0x4, fixed_abs, tag = 'smem constant byte address 0x4 - core index']
  #allocation1 [shape = 'u32[144,128]{1,0:T(1,128)}', space=vmem, size = 0x12000, scoped, tag = 'internal scratch']
  %s0 = inlined_call_operand.hbm [shape: f32[2,8,32], index: 0, kind: input, shape index: {}]
  %s1 = inlined_call_operand.hbm [shape: f32[2,8,32], index: 1, kind: input, shape index: {}]
  %s2 = inlined_call_operand.hbm [shape: f32[2,8,32], index: 2, kind: input, shape index: {}]
  %s3 = inlined_call_operand.hbm [shape: bf16[32,32], index: 3, kind: input, shape index: {}]
  %s4 = inlined_call_operand.vmem [shape: f32[1,32], index: 4, kind: input, shape index: {}]
  %s5 = inlined_call_operand.hbm [shape: bf16[32,32], index: 5, kind: input, shape index: {}]
  %s6 = inlined_call_operand.vmem [shape: f32[1,32], index: 6, kind: input, shape index: {}]
  %s7 = inlined_call_operand.hbm [shape: bf16[32,32], index: 7, kind: input, shape index: {}]
  %s8 = inlined_call_operand.vmem [shape: f32[1,32], index: 8, kind: input, shape index: {}]
  %s9 = inlined_call_operand.hbm [shape: bf16[2,4,8,8], index: 9, kind: output, shape index: {0}]
  %s10 = inlined_call_operand.hbm [shape: bf16[2,4,8,8], index: 10, kind: output, shape index: {1}]
  %s11 = inlined_call_operand.hbm [shape: bf16[2,4,8,8], index: 11, kind: output, shape index: {2}]
  %12 = xla_tuple %s9, %s10, %s11
  %s13 = sld [smem:[#allocation0]]
  $region109: #{tpu_custom_call.1} parent=0
    _
  %s15 = ssub.s32 1, %s13
  %s16 = scalar_select 0, %s15, %s13
  $region1: #{tpu_custom_call.1} parent=0
    #allocation2 [shape = 'u8[8192]{0}', space=vmem, size = 0x2000, scoped, tag = 'input window, operand 0']
    #allocation3 [shape = 's32[2]{0}', space=sflag, size = 0x8, scoped, tag = 'scoped memory for tpu_custom_call.1']
    #allocation4 [shape = 's32[2]{0}', space=sflag, size = 0x8, scoped, tag = 'scoped memory for tpu_custom_call.1']
    #allocation5 [shape = 'u8[8192]{0}', space=vmem, size = 0x2000, scoped, tag = 'input window, operand 1']
    #allocation6 [shape = 's32[2]{0}', space=sflag, size = 0x8, scoped, tag = 'scoped memory for tpu_custom_call.1']
    #allocation7 [shape = 'u8[8192]{0}', space=vmem, size = 0x2000, scoped, tag = 'input window, operand 2']
    #allocation8 [shape = 'u8[8192]{0}', space=vmem, size = 0x2000, scoped, tag = 'input window, operand 3, single buffered']
    #allocation9 [shape = 's32[1]{0}', space=sflag, size = 0x4, scoped, tag = 'scoped memory for tpu_custom_call.1']
    #allocation10 [shape = 'u8[8192]{0}', space=vmem, size = 0x2000, scoped, tag = 'input window, operand 5, single buffered']
    #allocation11 [shape = 'u8[8192]{0}', space=vmem, size = 0x2000, scoped, tag = 'input window, operand 7, single buffered']
    #allocation12 [shape = 's32[1]{0}', space=sflag, size = 0x4, scoped, tag = 'scoped memory for tpu_custom_call.1']
    #allocation13 [shape = 'u8[16384]{0}', space=vmem, size = 0x4000, scoped, tag = 'output window, operand 0']
    #allocation14 [shape = 'u8[16384]{0}', space=vmem, size = 0x4000, scoped, tag = 'output window, operand 1']
    #allocation15 [shape = 's32[2]{0}', space=sflag, size = 0x8, scoped, tag = 'scoped memory for tpu_custom_call.1']
    #allocation16 [shape = 'u8[16384]{0}', space=vmem, size = 0x4000, scoped, tag = 'output window, operand 2']
    %17 = vsyncpa [#allocation3], 0
    %s18 = scalar_lea.sflag [#allocation3], 1
    %19 = vsyncpa %s18, 0
    %20 = vsyncpa [#allocation6], 0
    %s21 = scalar_lea.sflag [#allocation6], 1
    %22 = vsyncpa %s21, 0
    %23 = vsyncpa [#allocation9], 0
    %24 = vsyncpa [#allocation12], 0
    %25 = vsyncpa [#allocation4], 0
    %s26 = scalar_lea.sflag [#allocation4], 1
    %27 = vsyncpa %s26, 0
    %28 = vsyncpa [#allocation15], 0
    %s29 = scalar_lea.sflag [#allocation15], 1
    %30 = vsyncpa %s29, 0
    loop: start=0, step=1, limit=4
    $region2: #{tpu_custom_call.1} parent=1 // loop_pre_header
      _
    $region3: #{tpu_custom_call.1} parent=1 // loop_header
      %s32 = sphi 0, %s36
      %p33 = scmp.ge.s32.totalorder %s32, 4
      %s39 = sphi 0, %s51
      %s40 = sphi 0, %s47
      %s41 = sphi 0, %s39
      %s42 = sphi 0, %s40
      %s43 = sphi 0, %s41
      %s44 = sphi 0, %s42
      %s56 = sphi 0, %s58
      %s59 = sphi 0, %s56
      %s60 = sphi 0, %s59
      %s76 = sphi 0, %s60
      %s84 = sphi 0, %s86
      %s87 = sphi 0, %s84
      %s88 = sphi 0, %s87
      %s104 = sphi 0, %s88
      %s112 = sphi 0, %s114
      %s115 = sphi 0, %s112
      %s116 = sphi 0, %s115
      %s132 = sphi 0, %s116
      %s136 = sphi 0, %s136
      %s138 = sphi 0, %s136
      %s139 = sphi 0, %s138
      %s153 = sphi 0, %s139
      %s157 = sphi 0, %s157
      %s159 = sphi 0, %s157
      %s160 = sphi 0, %s159
      %s174 = sphi 0, %s160
      %s178 = sphi 0, %s178
      %s180 = sphi 0, %s178
      %s181 = sphi 0, %s180
      %s195 = sphi 0, %s181
      %s199 = sphi 0, %s199
      %s201 = sphi 0, %s199
      %s202 = sphi 0, %s201
      %s216 = sphi 0, %s202
      %s220 = sphi 0, %s220
      %s222 = sphi 0, %s220
      %s223 = sphi 0, %s222
      %s237 = sphi 0, %s223
      %s241 = sphi 0, %s241
      %s243 = sphi 0, %s241
      %s244 = sphi 0, %s243
      %s258 = sphi 0, %s244
      %s266 = sphi 0, %s268
      %s269 = sphi 0, %s266
      %s270 = sphi 0, %s269
      %s286 = sphi 0, %s270
      %s294 = sphi 0, %s296
      %s297 = sphi 0, %s294
      %s298 = sphi 0, %s297
      %s314 = sphi 0, %s298
      %s322 = sphi 0, %s324
      %s325 = sphi 0, %s322
      %s326 = sphi 0, %s325
      %s342 = sphi 0, %s326
    $region4: #{tpu_custom_call.1} parent=1 // loop_header_branch
      %35 = sbr.rel (%p33) target = $region8
    $region5: #{tpu_custom_call.1} parent=1 // loop_body
      %s37 = ssub.s32 %s32, 1
      %s38 = ssub.s32 %s32, 2
      %s45 = sadd.s32 1, %s40
      %p46 = scmp.ge.s32.totalorder %s45, 1
      %s47 = scalar_select %p46, 0, %s45
      %s48 = sadd.s32 1, %s39
      %s49 = scalar_select %p46, %s48, %s39
      %p50 = scmp.ge.s32.totalorder %s49, 2
      %s51 = scalar_select %p50, 0, %s49
      %s52 = ssub.s32 %s39, %s51
      %s53 = ssub.s32 %s40, %s47
      %s54 = sor.u32 %s52, %s53
      %p55 = scmp.eq.s32.totalorder %s54, 0
      %s57 = sadd.s32 %s56, 1
      %s58 = scalar_select %p55, %s56, %s57
      %p61 = pneg %p55
      %p62 = scmp.eq.s32.totalorder %s32, 1
      %p63 = por %p61, %p62
      %p64 = scmp.ne.s32.totalorder %s56, %s59
      %p65 = scmp.eq.s32.totalorder %s32, 0
      %p66 = por %p64, %p65
      %p67 = scmp.ne.s32.totalorder %s56, %s59
      %p68 = scmp.eq.s32.totalorder %s37, 1
      %p69 = por %p67, %p68
      %p70 = scmp.ne.s32.totalorder %s59, %s60
      %p71 = scmp.eq.s32.totalorder %s37, 0
      %p72 = por %p70, %p71
      %p73 = scmp.ne.s32.totalorder %s59, %s60
      %p74 = scmp.eq.s32.totalorder %s38, 1
      %p75 = por %p73, %p74
      %p77 = scmp.ne.s32.totalorder %s60, %s76
      %p78 = scmp.eq.s32.totalorder %s38, 0
      %p79 = por %p77, %p78
      %s80 = ssub.s32 %s39, %s51
      %s81 = ssub.s32 %s40, %s47
      %s82 = sor.u32 %s80, %s81
      %p83 = scmp.eq.s32.totalorder %s82, 0
      %s85 = sadd.s32 %s84, 1
      %s86 = scalar_select %p83, %s84, %s85
      %p89 = pneg %p83
      %p90 = scmp.eq.s32.totalorder %s32, 1
      %p91 = por %p89, %p90
      %p92 = scmp.ne.s32.totalorder %s84, %s87
      %p93 = scmp.eq.s32.totalorder %s32, 0
      %p94 = por %p92, %p93
      %p95 = scmp.ne.s32.totalorder %s84, %s87
      %p96 = scmp.eq.s32.totalorder %s37, 1
      %p97 = por %p95, %p96
      %p98 = scmp.ne.s32.totalorder %s87, %s88
      %p99 = scmp.eq.s32.totalorder %s37, 0
      %p100 = por %p98, %p99
      %p101 = scmp.ne.s32.totalorder %s87, %s88
      %p102 = scmp.eq.s32.totalorder %s38, 1
      %p103 = por %p101, %p102
      %p105 = scmp.ne.s32.totalorder %s88, %s104
      %p106 = scmp.eq.s32.totalorder %s38, 0
      %p107 = por %p105, %p106
      %s108 = ssub.s32 %s39, %s51
      %s109 = ssub.s32 %s40, %s47
      %s110 = sor.u32 %s108, %s109
      %p111 = scmp.eq.s32.totalorder %s110, 0
      %s113 = sadd.s32 %s112, 1
      %s114 = scalar_select %p111, %s112, %s113
      %p117 = pneg %p111
      %p118 = scmp.eq.s32.totalorder %s32, 1
      %p119 = por %p117, %p118
      %p120 = scmp.ne.s32.totalorder %s112, %s115
      %p121 = scmp.eq.s32.totalorder %s32, 0
      %p122 = por %p120, %p121
      %p123 = scmp.ne.s32.totalorder %s112, %s115
      %p124 = scmp.eq.s32.totalorder %s37, 1
      %p125 = por %p123, %p124
      %p126 = scmp.ne.s32.totalorder %s115, %s116
      %p127 = scmp.eq.s32.totalorder %s37, 0
      %p128 = por %p126, %p127
      %p129 = scmp.ne.s32.totalorder %s115, %s116
      %p130 = scmp.eq.s32.totalorder %s38, 1
      %p131 = por %p129, %p130
      %p133 = scmp.ne.s32.totalorder %s116, %s132
      %p134 = scmp.eq.s32.totalorder %s38, 0
      %p135 = por %p133, %p134
      %s137 = sadd.s32 %s136, 1
      %p140 = scmp.eq.s32.totalorder %s32, 1
      %p141 = scmp.ne.s32.totalorder %s136, %s138
      %p142 = scmp.eq.s32.totalorder %s32, 0
      %p143 = por %p141, %p142
      %p144 = scmp.ne.s32.totalorder %s136, %s138
      %p145 = scmp.eq.s32.totalorder %s37, 1
      %p146 = por %p144, %p145
      %p147 = scmp.ne.s32.totalorder %s138, %s139
      %p148 = scmp.eq.s32.totalorder %s37, 0
      %p149 = por %p147, %p148
      %p150 = scmp.ne.s32.totalorder %s138, %s139
      %p151 = scmp.eq.s32.totalorder %s38, 1
      %p152 = por %p150, %p151
      %p154 = scmp.ne.s32.totalorder %s139, %s153
      %p155 = scmp.eq.s32.totalorder %s38, 0
      %p156 = por %p154, %p155
      %s158 = sadd.s32 %s157, 1
      %p161 = scmp.eq.s32.totalorder %s32, 1
      %p162 = scmp.ne.s32.totalorder %s157, %s159
      %p163 = scmp.eq.s32.totalorder %s32, 0
      %p164 = por %p162, %p163
      %p165 = scmp.ne.s32.totalorder %s157, %s159
      %p166 = scmp.eq.s32.totalorder %s37, 1
      %p167 = por %p165, %p166
      %p168 = scmp.ne.s32.totalorder %s159, %s160
      %p169 = scmp.eq.s32.totalorder %s37, 0
      %p170 = por %p168, %p169
      %p171 = scmp.ne.s32.totalorder %s159, %s160
      %p172 = scmp.eq.s32.totalorder %s38, 1
      %p173 = por %p171, %p172
      %p175 = scmp.ne.s32.totalorder %s160, %s174
      %p176 = scmp.eq.s32.totalorder %s38, 0
      %p177 = por %p175, %p176
      %s179 = sadd.s32 %s178, 1
      %p182 = scmp.eq.s32.totalorder %s32, 1
      %p183 = scmp.ne.s32.totalorder %s178, %s180
      %p184 = scmp.eq.s32.totalorder %s32, 0
      %p185 = por %p183, %p184
      %p186 = scmp.ne.s32.totalorder %s178, %s180
      %p187 = scmp.eq.s32.totalorder %s37, 1
      %p188 = por %p186, %p187
      %p189 = scmp.ne.s32.totalorder %s180, %s181
      %p190 = scmp.eq.s32.totalorder %s37, 0
      %p191 = por %p189, %p190
      %p192 = scmp.ne.s32.totalorder %s180, %s181
      %p193 = scmp.eq.s32.totalorder %s38, 1
      %p194 = por %p192, %p193
      %p196 = scmp.ne.s32.totalorder %s181, %s195
      %p197 = scmp.eq.s32.totalorder %s38, 0
      %p198 = por %p196, %p197
      %s200 = sadd.s32 %s199, 1
      %p203 = scmp.eq.s32.totalorder %s32, 1
      %p204 = scmp.ne.s32.totalorder %s199, %s201
      %p205 = scmp.eq.s32.totalorder %s32, 0
      %p206 = por %p204, %p205
      %p207 = scmp.ne.s32.totalorder %s199, %s201
      %p208 = scmp.eq.s32.totalorder %s37, 1
      %p209 = por %p207, %p208
      %p210 = scmp.ne.s32.totalorder %s201, %s202
      %p211 = scmp.eq.s32.totalorder %s37, 0
      %p212 = por %p210, %p211
      %p213 = scmp.ne.s32.totalorder %s201, %s202
      %p214 = scmp.eq.s32.totalorder %s38, 1
      %p215 = por %p213, %p214
      %p217 = scmp.ne.s32.totalorder %s202, %s216
      %p218 = scmp.eq.s32.totalorder %s38, 0
      %p219 = por %p217, %p218
      %s221 = sadd.s32 %s220, 1
      %p224 = scmp.eq.s32.totalorder %s32, 1
      %p225 = scmp.ne.s32.totalorder %s220, %s222
      %p226 = scmp.eq.s32.totalorder %s32, 0
      %p227 = por %p225, %p226
      %p228 = scmp.ne.s32.totalorder %s220, %s222
      %p229 = scmp.eq.s32.totalorder %s37, 1
      %p230 = por %p228, %p229
      %p231 = scmp.ne.s32.totalorder %s222, %s223
      %p232 = scmp.eq.s32.totalorder %s37, 0
      %p233 = por %p231, %p232
      %p234 = scmp.ne.s32.totalorder %s222, %s223
      %p235 = scmp.eq.s32.totalorder %s38, 1
      %p236 = por %p234, %p235
      %p238 = scmp.ne.s32.totalorder %s223, %s237
      %p239 = scmp.eq.s32.totalorder %s38, 0
      %p240 = por %p238, %p239
      %s242 = sadd.s32 %s241, 1
      %p245 = scmp.eq.s32.totalorder %s32, 1
      %p246 = scmp.ne.s32.totalorder %s241, %s243
      %p247 = scmp.eq.s32.totalorder %s32, 0
      %p248 = por %p246, %p247
      %p249 = scmp.ne.s32.totalorder %s241, %s243
      %p250 = scmp.eq.s32.totalorder %s37, 1
      %p251 = por %p249, %p250
      %p252 = scmp.ne.s32.totalorder %s243, %s244
      %p253 = scmp.eq.s32.totalorder %s37, 0
      %p254 = por %p252, %p253
      %p255 = scmp.ne.s32.totalorder %s243, %s244
      %p256 = scmp.eq.s32.totalorder %s38, 1
      %p257 = por %p255, %p256
      %p259 = scmp.ne.s32.totalorder %s244, %s258
      %p260 = scmp.eq.s32.totalorder %s38, 0
      %p261 = por %p259, %p260
      %s262 = ssub.s32 %s39, %s51
      %s263 = ssub.s32 %s40, %s47
      %s264 = sor.u32 %s262, %s263
      %p265 = scmp.eq.s32.totalorder %s264, 0
      %s267 = sadd.s32 %s266, 1
      %s268 = scalar_select %p265, %s266, %s267
      %p271 = pneg %p265
      %p272 = scmp.eq.s32.totalorder %s32, 1
      %p273 = por %p271, %p272
      %p274 = scmp.ne.s32.totalorder %s266, %s269
      %p275 = scmp.eq.s32.totalorder %s32, 0
      %p276 = por %p274, %p275
      %p277 = scmp.ne.s32.totalorder %s266, %s269
      %p278 = scmp.eq.s32.totalorder %s37, 1
      %p279 = por %p277, %p278
      %p280 = scmp.ne.s32.totalorder %s269, %s270
      %p281 = scmp.eq.s32.totalorder %s37, 0
      %p282 = por %p280, %p281
      %p283 = scmp.ne.s32.totalorder %s269, %s270
      %p284 = scmp.eq.s32.totalorder %s38, 1
      %p285 = por %p283, %p284
      %p287 = scmp.ne.s32.totalorder %s270, %s286
      %p288 = scmp.eq.s32.totalorder %s38, 0
      %p289 = por %p287, %p288
      %s290 = ssub.s32 %s39, %s51
      %s291 = ssub.s32 %s40, %s47
      %s292 = sor.u32 %s290, %s291
      %p293 = scmp.eq.s32.totalorder %s292, 0
      %s295 = sadd.s32 %s294, 1
      %s296 = scalar_select %p293, %s294, %s295
      %p299 = pneg %p293
      %p300 = scmp.eq.s32.totalorder %s32, 1
      %p301 = por %p299, %p300
      %p302 = scmp.ne.s32.totalorder %s294, %s297
      %p303 = scmp.eq.s32.totalorder %s32, 0
      %p304 = por %p302, %p303
      %p305 = scmp.ne.s32.totalorder %s294, %s297
      %p306 = scmp.eq.s32.totalorder %s37, 1
      %p307 = por %p305, %p306
      %p308 = scmp.ne.s32.totalorder %s297, %s298
      %p309 = scmp.eq.s32.totalorder %s37, 0
      %p310 = por %p308, %p309
      %p311 = scmp.ne.s32.totalorder %s297, %s298
      %p312 = scmp.eq.s32.totalorder %s38, 1
      %p313 = por %p311, %p312
      %p315 = scmp.ne.s32.totalorder %s298, %s314
      %p316 = scmp.eq.s32.totalorder %s38, 0
      %p317 = por %p315, %p316
      %s318 = ssub.s32 %s39, %s51
      %s319 = ssub.s32 %s40, %s47
      %s320 = sor.u32 %s318, %s319
      %p321 = scmp.eq.s32.totalorder %s320, 0
      %s323 = sadd.s32 %s322, 1
      %s324 = scalar_select %p321, %s322, %s323
      %p327 = pneg %p321
      %p328 = scmp.eq.s32.totalorder %s32, 1
      %p329 = por %p327, %p328
      %p330 = scmp.ne.s32.totalorder %s322, %s325
      %p331 = scmp.eq.s32.totalorder %s32, 0
      %p332 = por %p330, %p331
      %p333 = scmp.ne.s32.totalorder %s322, %s325
      %p334 = scmp.eq.s32.totalorder %s37, 1
      %p335 = por %p333, %p334
      %p336 = scmp.ne.s32.totalorder %s325, %s326
      %p337 = scmp.eq.s32.totalorder %s37, 0
      %p338 = por %p336, %p337
      %p339 = scmp.ne.s32.totalorder %s325, %s326
      %p340 = scmp.eq.s32.totalorder %s38, 1
      %p341 = por %p339, %p340
      %p343 = scmp.ne.s32.totalorder %s326, %s342
      %p344 = scmp.eq.s32.totalorder %s38, 0
      %p345 = por %p343, %p344
      %p346 = scmp.le.s32.totalorder 1, %s32
      %p347 = scmp.lt.s32.totalorder %s32, 3
      %p348 = pnand %p346, %p347
      %p349 = pneg %p348
      // Predicated region
      $region9: #{tpu_custom_call.1} parent=5 // pred_check
        _
      $region10: #{tpu_custom_call.1} parent=5 // pred_check_branch
        %351 = sbr.rel (%p348) target = $region12
      $region11: #{tpu_custom_call.1} parent=5 // pred_region
        %s352 = ssub.s32 %s32, 1
        // Predicated region
        $region13: #{tpu_custom_call.1} parent=11 // pred_check
          %p353 = pneg %p149
        $region14: #{tpu_custom_call.1} parent=11 // pred_check_branch
          %355 = sbr.rel (%p353) target = $region16
        $region15: #{tpu_custom_call.1} parent=11 // pred_region
          %s357 = ssub.s32 256, 256
          %358 = vsyncadd [#allocation9], %s357
          %s359 = sshll.u32 [#allocation8], 4
          %s360 = int_to_ptr.vmem [resolvable:$true] %s359
          %365 = dma.hbm_to_vmem [thread:$0]  %s3, 256, %s360, [#allocation9], 64, 64, 4
        $region16: #{tpu_custom_call.1} parent=11 // pred_fallthru
          _
        // Predicated region
        $region17: #{tpu_custom_call.1} parent=11 // pred_check
          %p366 = pneg %p170
        $region18: #{tpu_custom_call.1} parent=11 // pred_check_branch
          %368 = sbr.rel (%p366) target = $region20
        $region19: #{tpu_custom_call.1} parent=11 // pred_region
          _
        $region20: #{tpu_custom_call.1} parent=11 // pred_fallthru
          _
        // Predicated region
        $region21: #{tpu_custom_call.1} parent=11 // pred_check
          %p369 = pneg %p191
        $region22: #{tpu_custom_call.1} parent=11 // pred_check_branch
          %371 = sbr.rel (%p369) target = $region24
        $region23: #{tpu_custom_call.1} parent=11 // pred_region
          %s373 = ssub.s32 256, 256
          %374 = vsyncadd [#allocation9], %s373
          %s375 = sshll.u32 [#allocation10], 4
          %s376 = int_to_ptr.vmem [resolvable:$true] %s375
          %381 = dma.hbm_to_vmem [thread:$0]  %s5, 256, %s376, [#allocation9], 64, 64, 4
        $region24: #{tpu_custom_call.1} parent=11 // pred_fallthru
          _
        // Predicated region
        $region25: #{tpu_custom_call.1} parent=11 // pred_check
          %p382 = pneg %p212
        $region26: #{tpu_custom_call.1} parent=11 // pred_check_branch
          %384 = sbr.rel (%p382) target = $region28
        $region27: #{tpu_custom_call.1} parent=11 // pred_region
          _
        $region28: #{tpu_custom_call.1} parent=11 // pred_fallthru
          _
        // Predicated region
        $region29: #{tpu_custom_call.1} parent=11 // pred_check
          %p385 = pneg %p233
        $region30: #{tpu_custom_call.1} parent=11 // pred_check_branch
          %387 = sbr.rel (%p385) target = $region32
        $region31: #{tpu_custom_call.1} parent=11 // pred_region
          %s389 = ssub.s32 256, 256
          %390 = vsyncadd [#allocation12], %s389
          %s391 = sshll.u32 [#allocation11], 4
          %s392 = int_to_ptr.vmem [resolvable:$true] %s391
          %397 = dma.hbm_to_vmem [thread:$0]  %s7, 256, %s392, [#allocation12], 64, 64, 4
        $region32: #{tpu_custom_call.1} parent=11 // pred_fallthru
          _
        // Predicated region
        $region33: #{tpu_custom_call.1} parent=11 // pred_check
          %p398 = pneg %p254
        $region34: #{tpu_custom_call.1} parent=11 // pred_check_branch
          %400 = sbr.rel (%p398) target = $region36
        $region35: #{tpu_custom_call.1} parent=11 // pred_region
          _
        $region36: #{tpu_custom_call.1} parent=11 // pred_fallthru
          _
      $region12: #{tpu_custom_call.1} parent=5 // pred_fallthru
        _
      %p401 = scmp.lt.s32.totalorder %s32, 2
      // Predicated region
      $region37: #{tpu_custom_call.1} parent=5 // pred_check
        %p402 = pneg %p401
      $region38: #{tpu_custom_call.1} parent=5 // pred_check_branch
        %404 = sbr.rel (%p402) target = $region40
      $region39: #{tpu_custom_call.1} parent=5 // pred_region
        // Predicated region
        $region41: #{tpu_custom_call.1} parent=39 // pred_check
          %p405 = pneg %p66
        $region42: #{tpu_custom_call.1} parent=39 // pred_check_branch
          %407 = sbr.rel (%p405) target = $region44
        $region43: #{tpu_custom_call.1} parent=39 // pred_region
          %s408 = sand.u32 %s56, 1
          %s409 = scalar_lea.sflag [#allocation3], %s408
          %s410 = sand.u32 %s56, 1
          %s411 = smul.addr %s410, 8
          %s412 = scalar_lea.vmem [#allocation2], %s411
          %s414 = ssub.s32 128, 128
          %415 = vsyncadd %s409, %s414
          %s416 = sadd.s32 %s40, %s39
          %s417 = smul.addr %s416, 128
          %s418 = scalar_lea.hbm %s0, %s417
          %s420 = sshll.u32 %s412, 4
          %s421 = int_to_ptr.vmem [resolvable:$true] %s420
          %423 = dma.hbm_to_vmem [thread:$0]  %s418, 128, %s421, %s409
        $region44: #{tpu_custom_call.1} parent=39 // pred_fallthru
          _
        // Predicated region
        $region45: #{tpu_custom_call.1} parent=39 // pred_check
          %p424 = pneg %p94
        $region46: #{tpu_custom_call.1} parent=39 // pred_check_branch
          %426 = sbr.rel (%p424) target = $region48
        $region47: #{tpu_custom_call.1} parent=39 // pred_region
          %s427 = sand.u32 %s32, 1
          %s428 = scalar_lea.sflag [#allocation6], %s427
          %s429 = sand.u32 %s84, 1
          %s430 = smul.addr %s429, 8
          %s431 = scalar_lea.vmem [#allocation5], %s430
          %s433 = ssub.s32 128, 128
          %434 = vsyncadd %s428, %s433
          %s435 = sadd.s32 %s40, %s39
          %s436 = smul.addr %s435, 128
          %s437 = scalar_lea.hbm %s1, %s436
          %s439 = sshll.u32 %s431, 4
          %s440 = int_to_ptr.vmem [resolvable:$true] %s439
          %442 = dma.hbm_to_vmem [thread:$0]  %s437, 128, %s440, %s428
        $region48: #{tpu_custom_call.1} parent=39 // pred_fallthru
          _
        // Predicated region
        $region49: #{tpu_custom_call.1} parent=39 // pred_check
          %p443 = pneg %p122
        $region50: #{tpu_custom_call.1} parent=39 // pred_check_branch
          %445 = sbr.rel (%p443) target = $region52
        $region51: #{tpu_custom_call.1} parent=39 // pred_region
          %s446 = sand.u32 %s32, 1
          %s447 = scalar_lea.sflag [#allocation6], %s446
          %s448 = sand.u32 %s112, 1
          %s449 = smul.addr %s448, 8
          %s450 = scalar_lea.vmem [#allocation7], %s449
          %s452 = ssub.s32 128, 128
          %453 = vsyncadd %s447, %s452
          %s454 = sadd.s32 %s40, %s39
          %s455 = smul.addr %s454, 128
          %s456 = scalar_lea.hbm %s2, %s455
          %s458 = sshll.u32 %s450, 4
          %s459 = int_to_ptr.vmem [resolvable:$true] %s458
          %461 = dma.hbm_to_vmem [thread:$0]  %s456, 128, %s459, %s447
        $region52: #{tpu_custom_call.1} parent=39 // pred_fallthru
          _
      $region40: #{tpu_custom_call.1} parent=5 // pred_fallthru
        _
      %p462 = scmp.le.s32.totalorder 1, %s32
      %p463 = scmp.lt.s32.totalorder %s32, 3
      %p464 = pnand %p462, %p463
      %p465 = pneg %p464
      // Predicated region
      $region53: #{tpu_custom_call.1} parent=5 // pred_check
        _
      $region54: #{tpu_custom_call.1} parent=5 // pred_check_branch
        %467 = sbr.rel (%p464) target = $region56
      $region55: #{tpu_custom_call.1} parent=5 // pred_region
        %s468 = ssub.s32 %s32, 1
        %s469 = sand.u32 %s59, 1
        %s470 = scalar_lea.sflag [#allocation3], %s469
        %s471 = sand.u32 %s59, 1
        %s472 = smul.addr %s471, 8
        %s473 = scalar_lea.vmem [#allocation2], %s472
        // Predicated region
        $region57: #{tpu_custom_call.1} parent=55 // pred_check
          %p474 = pneg %p72
        $region58: #{tpu_custom_call.1} parent=55 // pred_check_branch
          %476 = sbr.rel (%p474) target = $region60
        $region59: #{tpu_custom_call.1} parent=55 // pred_region
          %477 = dma.done %s470, 128
        $region60: #{tpu_custom_call.1} parent=55 // pred_fallthru
          _
        %s478 = sand.u32 %s37, 1
        %s479 = scalar_lea.sflag [#allocation6], %s478
        %s480 = sand.u32 %s87, 1
        %s481 = smul.addr %s480, 8
        %s482 = scalar_lea.vmem [#allocation5], %s481
        // Predicated region
        $region61: #{tpu_custom_call.1} parent=55 // pred_check
          %p483 = pneg %p100
        $region62: #{tpu_custom_call.1} parent=55 // pred_check_branch
          %485 = sbr.rel (%p483) target = $region64
        $region63: #{tpu_custom_call.1} parent=55 // pred_region
          %486 = dma.done %s479, 128
        $region64: #{tpu_custom_call.1} parent=55 // pred_fallthru
          _
        %s487 = sand.u32 %s37, 1
        %s488 = scalar_lea.sflag [#allocation6], %s487
        %s489 = sand.u32 %s115, 1
        %s490 = smul.addr %s489, 8
        %s491 = scalar_lea.vmem [#allocation7], %s490
        // Predicated region
        $region65: #{tpu_custom_call.1} parent=55 // pred_check
          %p492 = pneg %p128
        $region66: #{tpu_custom_call.1} parent=55 // pred_check_branch
          %494 = sbr.rel (%p492) target = $region68
        $region67: #{tpu_custom_call.1} parent=55 // pred_region
          %495 = dma.done %s488, 128
        $region68: #{tpu_custom_call.1} parent=55 // pred_fallthru
          _
        // Predicated region
        $region69: #{tpu_custom_call.1} parent=55 // pred_check
          %p496 = pneg %p149
        $region70: #{tpu_custom_call.1} parent=55 // pred_check_branch
          %498 = sbr.rel (%p496) target = $region72
        $region71: #{tpu_custom_call.1} parent=55 // pred_region
          %499 = dma.done [#allocation9], 256
        $region72: #{tpu_custom_call.1} parent=55 // pred_fallthru
          _
        // Predicated region
        $region73: #{tpu_custom_call.1} parent=55 // pred_check
          %p500 = pneg %p191
        $region74: #{tpu_custom_call.1} parent=55 // pred_check_branch
          %502 = sbr.rel (%p500) target = $region76
        $region75: #{tpu_custom_call.1} parent=55 // pred_region
          %503 = dma.done [#allocation9], 256
        $region76: #{tpu_custom_call.1} parent=55 // pred_fallthru
          _
        // Predicated region
        $region77: #{tpu_custom_call.1} parent=55 // pred_check
          %p504 = pneg %p233
        $region78: #{tpu_custom_call.1} parent=55 // pred_check_branch
          %506 = sbr.rel (%p504) target = $region80
        $region79: #{tpu_custom_call.1} parent=55 // pred_region
          %507 = dma.done [#allocation12], 256
        $region80: #{tpu_custom_call.1} parent=55 // pred_fallthru
          _
        %s508 = sand.u32 %s59, 1
        %s509 = scalar_lea.sflag [#allocation3], %s508
        %s510 = sand.u32 %s59, 1
        %s511 = smul.addr %s510, 8
        %s512 = scalar_lea.vmem [#allocation2], %s511
        %p513 = pneg %p72
        %p514 = pneg %p69
        %s515 = sand.u32 %s37, 1
        %s516 = scalar_lea.sflag [#allocation6], %s515
        %s517 = sand.u32 %s87, 1
        %s518 = smul.addr %s517, 8
        %s519 = scalar_lea.vmem [#allocation5], %s518
        %p520 = pneg %p100
        %p521 = pneg %p97
        %s522 = sand.u32 %s37, 1
        %s523 = scalar_lea.sflag [#allocation6], %s522
        %s524 = sand.u32 %s115, 1
        %s525 = smul.addr %s524, 8
        %s526 = scalar_lea.vmem [#allocation7], %s525
        %p527 = pneg %p128
        %p528 = pneg %p125
        %p529 = pneg %p149
        %p530 = pneg %p146
        %p531 = pneg %p170
        %p532 = pneg %p167
        %p533 = pneg %p191
        %p534 = pneg %p188
        %p535 = pneg %p212
        %p536 = pneg %p209
        %p537 = pneg %p233
        %p538 = pneg %p230
        %p539 = pneg %p254
        %p540 = pneg %p251
        %p541 = pneg %p282
        %p542 = pneg %p279
        %s543 = sand.u32 %s269, 1
        %s544 = scalar_lea.sflag [#allocation4], %s543
        %s545 = sand.u32 %s269, 1
        %s546 = smul.addr %s545, 16
        %s547 = scalar_lea.vmem [#allocation13], %s546
        %p548 = pneg %p310
        %p549 = pneg %p307
        %s550 = sand.u32 %s37, 1
        %s551 = scalar_lea.sflag [#allocation15], %s550
        %s552 = sand.u32 %s297, 1
        %s553 = smul.addr %s552, 16
        %s554 = scalar_lea.vmem [#allocation14], %s553
        %p555 = pneg %p338
        %p556 = pneg %p335
        %s557 = sand.u32 %s37, 1
        %s558 = scalar_lea.sflag [#allocation15], %s557
        %s559 = sand.u32 %s325, 1
        %s560 = smul.addr %s559, 16
        %s561 = scalar_lea.vmem [#allocation16], %s560
        %v563 = vld [vmem:[%s473] sm:$0xff]
        %v564 = vpack.c.bf16 %v563, %v563
        %v565 = vld [vmem:[#allocation8] sm:$0xf]
        %v566 = vld [vmem:[#allocation8 + $0x4] sm:$0xf]
        %v567 = vld [vmem:[#allocation8 + $0x8] sm:$0xf]
        %v568 = vld [vmem:[#allocation8 + $0xc] sm:$0xf]
        %v569 = vld [vmem:[%s4] sm:$0x1]
        %v571 = vlaneseq
        %v572 = vshrl.u32 %v571, 7
        %v573 = vsub.s32 0, %v572
        %v574 = vrot.slane %v569, %v573
        %v580 = vunpack.c.l.b16 %v565
        %v581 = vunpack.c.l.b16 %v566
        %v582 = vunpack.c.l.b16 %v567
        %v583 = vunpack.c.l.b16 %v568
        %v584 = vpack.c.b16 %v581, %v580
        %v585 = vpack.c.b16 %v583, %v582
        %vm588 = vcmask 261120
        %v590 = vsel %vm588, %v564, 0
        %592 = vmatprep.subr.bf16.mxu0 0
        %593 = vmatpush1.bf16.msra.mxu0 0
        %594 = vmatprep.subr.bf16.mxu0 0
        %595 = vmatpush1.bf16.msra.mxu0 0
        %596 = vmatprep.subr.bf16.mxu0 0
        %597 = vmatpush1.bf16.msra.mxu0 0
        %598 = vmatprep.subr.bf16.mxu0 0
        %599 = vmatpush1.bf16.msra.mxu0 0
        %600 = vmatprep.subr.bf16.mxu0 0
        %601 = vmatpush1.bf16.msra.mxu0 0
        %602 = vmatprep.subr.bf16.mxu0 0
        %603 = vmatpush1.bf16.msra.mxu0 0
        %604 = vmatprep.subr.bf16.mxu0 0
        %605 = vmatpush1.bf16.msra.mxu0 %v585
        %606 = vmatprep.subr.bf16.mxu0 0
        %607 = vmatpush1.bf16.msra.mxu0 %v584
        %608 = vmatprep.subr.bf16.mxu0 0
        %609 = vmatpush2.bf16.msra.mxu0 0
        %610 = vmatprep.subr.bf16.mxu0 0
        %611 = vmatpush2.bf16.msra.mxu0 0
        %612 = vmatprep.subr.bf16.mxu0 0
        %613 = vmatpush2.bf16.msra.mxu0 0
        %614 = vmatprep.subr.bf16.mxu0 0
        %615 = vmatpush2.bf16.msra.mxu0 0
        %616 = vmatprep.subr.bf16.mxu0 0
        %617 = vmatpush2.bf16.msra.mxu0 0
        %618 = vmatprep.subr.bf16.mxu0 0
        %619 = vmatpush2.bf16.msra.mxu0 0
        %620 = vmatprep.subr.bf16.mxu0 0
        %621 = vmatpush2.bf16.msra.mxu0 0
        %622 = vmatprep.subr.bf16.mxu0 0
        %623 = vmatpush2.bf16.msra.mxu0 0
        %624 = vmatprep.mubr.bf16.mxu0 0
        %625 = vmatmul.mubr.bf16.gmra.mxu0 %v590
        %v626 = vpop.f32.mrf.mxu0
        %v627 = vadd.f32 %v574, %v626
        %v628 = vpop.f32.mrf.mxu0
        %v629 = vpop.f32.mrf.mxu0
        %v630 = vpop.f32.mrf.mxu0
        %631 = vdwg.mxu0
        %v632 = vmul.f32 %v627, 0.35355338
        %v633 = vpack.c.bf16 %v632, %v632
        %vm634 = vcmask 60416
        %635 = vst.msk [vmem:[%s547] sm:$0xf] %vm634, %v633
        %v637 = vunpack.c.l.b16 %v633
        %v638 = vpack.c.b16 %v637, %v637
        %639 = vrot.lane.b32.xlu0 %v638, 120
        %v640 = vpop.permute.xlu0 %639
        %s642 = scalar_lea.vmem %s547, 4 [#allocation13]
        %643 = vst.msk [vmem:[%s642] sm:$0xf] %vm634, %v640
        %644 = vrot.lane.b32.xlu0 %v638, 112
        %v645 = vpop.permute.xlu0 %644
        %s647 = scalar_lea.vmem %s547, 8 [#allocation13]
        %648 = vst.msk [vmem:[%s647] sm:$0xf] %vm634, %v645
        %649 = vrot.lane.b32.xlu0 %v638, 104
        %v650 = vpop.permute.xlu0 %649
        %s652 = scalar_lea.vmem %s547, 12 [#allocation13]
        %653 = vst.msk [vmem:[%s652] sm:$0xf] %vm634, %v650
        %v654 = vld [vmem:[%s482] sm:$0xff]
        %v655 = vpack.c.bf16 %v654, %v654
        %v656 = vld [vmem:[#allocation10] sm:$0xf]
        %v657 = vld [vmem:[#allocation10 + $0x4] sm:$0xf]
        %v658 = vld [vmem:[#allocation10 + $0x8] sm:$0xf]
        %v659 = vld [vmem:[#allocation10 + $0xc] sm:$0xf]
        %v660 = vld [vmem:[%s6] sm:$0x1]
        %v662 = vlaneseq
        %v663 = vshrl.u32 %v662, 7
        %v664 = vsub.s32 0, %v663
        %v665 = vrot.slane %v660, %v664
        %v671 = vunpack.c.l.b16 %v656
        %v672 = vunpack.c.l.b16 %v657
        %v673 = vunpack.c.l.b16 %v658
        %v674 = vunpack.c.l.b16 %v659
        %v675 = vpack.c.b16 %v672, %v671
        %v676 = vpack.c.b16 %v674, %v673
        %v680 = vsel %vm588, %v655, 0
        %682 = vmatprep.subr.bf16.mxu0 0
        %683 = vmatpush1.bf16.msra.mxu0 0
        %684 = vmatprep.subr.bf16.mxu0 0
        %685 = vmatpush1.bf16.msra.mxu0 0
        %686 = vmatprep.subr.bf16.mxu0 0
        %687 = vmatpush1.bf16.msra.mxu0 0
        %688 = vmatprep.subr.bf16.mxu0 0
        %689 = vmatpush1.bf16.msra.mxu0 0
        %690 = vmatprep.subr.bf16.mxu0 0
        %691 = vmatpush1.bf16.msra.mxu0 0
        %692 = vmatprep.subr.bf16.mxu0 0
        %693 = vmatpush1.bf16.msra.mxu0 0
        %694 = vmatprep.subr.bf16.mxu0 0
        %695 = vmatpush1.bf16.msra.mxu0 %v676
        %696 = vmatprep.subr.bf16.mxu0 0
        %697 = vmatpush1.bf16.msra.mxu0 %v675
        %698 = vmatprep.subr.bf16.mxu0 0
        %699 = vmatpush2.bf16.msra.mxu0 0
        %700 = vmatprep.subr.bf16.mxu0 0
        %701 = vmatpush2.bf16.msra.mxu0 0
        %702 = vmatprep.subr.bf16.mxu0 0
        %703 = vmatpush2.bf16.msra.mxu0 0
        %704 = vmatprep.subr.bf16.mxu0 0
        %705 = vmatpush2.bf16.msra.mxu0 0
        %706 = vmatprep.subr.bf16.mxu0 0
        %707 = vmatpush2.bf16.msra.mxu0 0
        %708 = vmatprep.subr.bf16.mxu0 0
        %709 = vmatpush2.bf16.msra.mxu0 0
        %710 = vmatprep.subr.bf16.mxu0 0
        %711 = vmatpush2.bf16.msra.mxu0 0
        %712 = vmatprep.subr.bf16.mxu0 0
        %713 = vmatpush2.bf16.msra.mxu0 0
        %714 = vmatprep.mubr.bf16.mxu0 0
        %715 = vmatmul.mubr.bf16.gmra.mxu0 %v680
        %v716 = vpop.f32.mrf.mxu0
        %v717 = vadd.f32 %v665, %v716
        %v718 = vpop.f32.mrf.mxu0
        %v719 = vpop.f32.mrf.mxu0
        %v720 = vpop.f32.mrf.mxu0
        %721 = vdwg.mxu0
        %v722 = vpack.c.bf16 %v717, %v717
        %723 = vst.msk [vmem:[%s554] sm:$0xf] %vm634, %v722
        %v725 = vunpack.c.l.b16 %v722
        %v726 = vpack.c.b16 %v725, %v725
        %727 = vrot.lane.b32.xlu0 %v726, 120
        %v728 = vpop.permute.xlu0 %727
        %s730 = scalar_lea.vmem %s554, 4 [#allocation14]
        %731 = vst.msk [vmem:[%s730] sm:$0xf] %vm634, %v728
        %732 = vrot.lane.b32.xlu0 %v726, 112
        %v733 = vpop.permute.xlu0 %732
        %s735 = scalar_lea.vmem %s554, 8 [#allocation14]
        %736 = vst.msk [vmem:[%s735] sm:$0xf] %vm634, %v733
        %737 = vrot.lane.b32.xlu0 %v726, 104
        %v738 = vpop.permute.xlu0 %737
        %s740 = scalar_lea.vmem %s554, 12 [#allocation14]
        %741 = vst.msk [vmem:[%s740] sm:$0xf] %vm634, %v738
        %v742 = vld [vmem:[%s491] sm:$0xff]
        %v743 = vpack.c.bf16 %v742, %v742
        %v744 = vld [vmem:[#allocation11] sm:$0xf]
        %v745 = vld [vmem:[#allocation11 + $0x4] sm:$0xf]
        %v746 = vld [vmem:[#allocation11 + $0x8] sm:$0xf]
        %v747 = vld [vmem:[#allocation11 + $0xc] sm:$0xf]
        %v748 = vld [vmem:[%s8] sm:$0x1]
        %v750 = vlaneseq
        %v751 = vshrl.u32 %v750, 7
        %v752 = vsub.s32 0, %v751
        %v753 = vrot.slane %v748, %v752
        %v759 = vunpack.c.l.b16 %v744
        %v760 = vunpack.c.l.b16 %v745
        %v761 = vunpack.c.l.b16 %v746
        %v762 = vunpack.c.l.b16 %v747
        %v763 = vpack.c.b16 %v760, %v759
        %v764 = vpack.c.b16 %v762, %v761
        %v768 = vsel %vm588, %v743, 0
        %770 = vmatprep.subr.bf16.mxu0 0
        %771 = vmatpush1.bf16.msra.mxu0 0
        %772 = vmatprep.subr.bf16.mxu0 0
        %773 = vmatpush1.bf16.msra.mxu0 0
        %774 = vmatprep.subr.bf16.mxu0 0
        %775 = vmatpush1.bf16.msra.mxu0 0
        %776 = vmatprep.subr.bf16.mxu0 0
        %777 = vmatpush1.bf16.msra.mxu0 0
        %778 = vmatprep.subr.bf16.mxu0 0
        %779 = vmatpush1.bf16.msra.mxu0 0
        %780 = vmatprep.subr.bf16.mxu0 0
        %781 = vmatpush1.bf16.msra.mxu0 0
        %782 = vmatprep.subr.bf16.mxu0 0
        %783 = vmatpush1.bf16.msra.mxu0 %v764
        %784 = vmatprep.subr.bf16.mxu0 0
        %785 = vmatpush1.bf16.msra.mxu0 %v763
        %786 = vmatprep.subr.bf16.mxu0 0
        %787 = vmatpush2.bf16.msra.mxu0 0
        %788 = vmatprep.subr.bf16.mxu0 0
        %789 = vmatpush2.bf16.msra.mxu0 0
        %790 = vmatprep.subr.bf16.mxu0 0
        %791 = vmatpush2.bf16.msra.mxu0 0
        %792 = vmatprep.subr.bf16.mxu0 0
        %793 = vmatpush2.bf16.msra.mxu0 0
        %794 = vmatprep.subr.bf16.mxu0 0
        %795 = vmatpush2.bf16.msra.mxu0 0
        %796 = vmatprep.subr.bf16.mxu0 0
        %797 = vmatpush2.bf16.msra.mxu0 0
        %798 = vmatprep.subr.bf16.mxu0 0
        %799 = vmatpush2.bf16.msra.mxu0 0
        %800 = vmatprep.subr.bf16.mxu0 0
        %801 = vmatpush2.bf16.msra.mxu0 0
        %802 = vmatprep.mubr.bf16.mxu0 0
        %803 = vmatmul.mubr.bf16.gmra.mxu0 %v768
        %v804 = vpop.f32.mrf.mxu0
        %v805 = vadd.f32 %v753, %v804
        %v806 = vpop.f32.mrf.mxu0
        %v807 = vpop.f32.mrf.mxu0
        %v808 = vpop.f32.mrf.mxu0
        %809 = vdwg.mxu0
        %v810 = vpack.c.bf16 %v805, %v805
        %811 = vst.msk [vmem:[%s561] sm:$0xf] %vm634, %v810
        %v813 = vunpack.c.l.b16 %v810
        %v814 = vpack.c.b16 %v813, %v813
        %815 = vrot.lane.b32.xlu0 %v814, 120
        %v816 = vpop.permute.xlu0 %815
        %s818 = scalar_lea.vmem %s561, 4 [#allocation16]
        %819 = vst.msk [vmem:[%s818] sm:$0xf] %vm634, %v816
        %820 = vrot.lane.b32.xlu0 %v814, 112
        %v821 = vpop.permute.xlu0 %820
        %s823 = scalar_lea.vmem %s561, 8 [#allocation16]
        %824 = vst.msk [vmem:[%s823] sm:$0xf] %vm634, %v821
        %825 = vrot.lane.b32.xlu0 %v814, 104
        %v826 = vpop.permute.xlu0 %825
        %s828 = scalar_lea.vmem %s561, 12 [#allocation16]
        %829 = vst.msk [vmem:[%s828] sm:$0xf] %vm634, %v826
        %s830 = sand.u32 %s269, 1
        %s831 = scalar_lea.sflag [#allocation4], %s830
        %s832 = sand.u32 %s269, 1
        %s833 = smul.addr %s832, 16
        %s834 = scalar_lea.vmem [#allocation13], %s833
        %s835 = sand.u32 %s37, 1
        %s836 = scalar_lea.sflag [#allocation15], %s835
        %s837 = sand.u32 %s297, 1
        %s838 = smul.addr %s837, 16
        %s839 = scalar_lea.vmem [#allocation14], %s838
        %s840 = sand.u32 %s37, 1
        %s841 = scalar_lea.sflag [#allocation15], %s840
        %s842 = sand.u32 %s325, 1
        %s843 = smul.addr %s842, 16
        %s844 = scalar_lea.vmem [#allocation16], %s843
        // Predicated region
        $region81: #{tpu_custom_call.1} parent=55 // pred_check
          %p845 = pneg %p279
        $region82: #{tpu_custom_call.1} parent=55 // pred_check_branch
          %847 = sbr.rel (%p845) target = $region84
        $region83: #{tpu_custom_call.1} parent=55 // pred_region
          %s849 = ssub.s32 256, 256
          %850 = vsyncadd %s831, %s849
          %s851 = smul.addr %s41, 4
          %s852 = sadd.s32 %s42, %s851
          %s853 = smul.addr %s852, 64
          %s854 = scalar_lea.hbm %s9, %s853
          %s855 = sshll.u32 %s834, 4
          %s856 = int_to_ptr.vmem [resolvable:$true] %s855
          %861 = dma.vmem_to_hbm [thread:$0]  %s856, 256, %s854, %s831, 64, 64, 4
        $region84: #{tpu_custom_call.1} parent=55 // pred_fallthru
          _
        // Predicated region
        $region85: #{tpu_custom_call.1} parent=55 // pred_check
          %p862 = pneg %p307
        $region86: #{tpu_custom_call.1} parent=55 // pred_check_branch
          %864 = sbr.rel (%p862) target = $region88
        $region87: #{tpu_custom_call.1} parent=55 // pred_region
          %s866 = ssub.s32 256, 256
          %867 = vsyncadd %s836, %s866
          %s868 = smul.addr %s41, 4
          %s869 = sadd.s32 %s42, %s868
          %s870 = smul.addr %s869, 64
          %s871 = scalar_lea.hbm %s10, %s870
          %s872 = sshll.u32 %s839, 4
          %s873 = int_to_ptr.vmem [resolvable:$true] %s872
          %878 = dma.vmem_to_hbm [thread:$0]  %s873, 256, %s871, %s836, 64, 64, 4
        $region88: #{tpu_custom_call.1} parent=55 // pred_fallthru
          _
        // Predicated region
        $region89: #{tpu_custom_call.1} parent=55 // pred_check
          %p879 = pneg %p335
        $region90: #{tpu_custom_call.1} parent=55 // pred_check_branch
          %881 = sbr.rel (%p879) target = $region92
        $region91: #{tpu_custom_call.1} parent=55 // pred_region
          %s883 = ssub.s32 256, 256
          %884 = vsyncadd %s841, %s883
          %s885 = smul.addr %s41, 4
          %s886 = sadd.s32 %s42, %s885
          %s887 = smul.addr %s886, 64
          %s888 = scalar_lea.hbm %s11, %s887
          %s889 = sshll.u32 %s844, 4
          %s890 = int_to_ptr.vmem [resolvable:$true] %s889
          %895 = dma.vmem_to_hbm [thread:$0]  %s890, 256, %s888, %s841, 64, 64, 4
        $region92: #{tpu_custom_call.1} parent=55 // pred_fallthru
          _
      $region56: #{tpu_custom_call.1} parent=5 // pred_fallthru
        _
      %p896 = scmp.le.s32.totalorder 2, %s32
      // Predicated region
      $region93: #{tpu_custom_call.1} parent=5 // pred_check
        %p897 = pneg %p896
      $region94: #{tpu_custom_call.1} parent=5 // pred_check_branch
        %899 = sbr.rel (%p897) target = $region96
      $region95: #{tpu_custom_call.1} parent=5 // pred_region
        %s900 = ssub.s32 %s32, 2
        // Predicated region
        $region97: #{tpu_custom_call.1} parent=95 // pred_check
          %p901 = pneg %p285
        $region98: #{tpu_custom_call.1} parent=95 // pred_check_branch
          %903 = sbr.rel (%p901) target = $region100
        $region99: #{tpu_custom_call.1} parent=95 // pred_region
          %s904 = sand.u32 %s270, 1
          %s905 = scalar_lea.sflag [#allocation4], %s904
          %s906 = sand.u32 %s270, 1
          %s907 = smul.addr %s906, 16
          %s908 = scalar_lea.vmem [#allocation13], %s907
          %909 = dma.done %s905, 256
        $region100: #{tpu_custom_call.1} parent=95 // pred_fallthru
          _
        // Predicated region
        $region101: #{tpu_custom_call.1} parent=95 // pred_check
          %p910 = pneg %p313
        $region102: #{tpu_custom_call.1} parent=95 // pred_check_branch
          %912 = sbr.rel (%p910) target = $region104
        $region103: #{tpu_custom_call.1} parent=95 // pred_region
          %s913 = sand.u32 %s38, 1
          %s914 = scalar_lea.sflag [#allocation15], %s913
          %s915 = sand.u32 %s298, 1
          %s916 = smul.addr %s915, 16
          %s917 = scalar_lea.vmem [#allocation14], %s916
          %918 = dma.done %s914, 256
        $region104: #{tpu_custom_call.1} parent=95 // pred_fallthru
          _
        // Predicated region
        $region105: #{tpu_custom_call.1} parent=95 // pred_check
          %p919 = pneg %p341
        $region106: #{tpu_custom_call.1} parent=95 // pred_check_branch
          %921 = sbr.rel (%p919) target = $region108
        $region107: #{tpu_custom_call.1} parent=95 // pred_region
          %s922 = sand.u32 %s38, 1
          %s923 = scalar_lea.sflag [#allocation15], %s922
          %s924 = sand.u32 %s326, 1
          %s925 = smul.addr %s924, 16
          %s926 = scalar_lea.vmem [#allocation16], %s925
          %927 = dma.done %s923, 256
        $region108: #{tpu_custom_call.1} parent=95 // pred_fallthru
          _
      $region96: #{tpu_custom_call.1} parent=5 // pred_fallthru
        _
    $region6: #{tpu_custom_call.1} parent=1 // loop_footer
      %s36 = sadd.s32 1, %s32
    $region7: #{tpu_custom_call.1} parent=1 // loop_footer_branch
      %31 = sbr.rel target = $region3
    $region8: #{tpu_custom_call.1} parent=1 // loop_exit
      _
    %928 = vsyncpa [#allocation3], 1
    %s929 = scalar_lea.sflag [#allocation3], 1
    %930 = vsyncpa %s929, 1
    %931 = vsyncpa [#allocation6], 1
    %s932 = scalar_lea.sflag [#allocation6], 1
    %933 = vsyncpa %s932, 1
    %934 = vsyncpa [#allocation9], 1
    %935 = vsyncpa [#allocation12], 1
    %936 = vsyncpa [#allocation4], 1
    %s937 = scalar_lea.sflag [#allocation4], 1
    %938 = vsyncpa %s937, 1
    %939 = vsyncpa [#allocation15], 1
    %s940 = scalar_lea.sflag [#allocation15], 1
    %941 = vsyncpa %s940, 1

</llo_original>
